<compile_context>
chip_gen: v5e
topology: v5e:2x2
jax: 0.10.0
libtpu: 0.0.40
codegen_flags: <defaults>
</compile_context>

<pallas_src>
import functools
import math

import jax
import jax.numpy as jnp
from jax.experimental import pallas as pl
from jax.experimental.pallas import tpu as pltpu


# ----------------------------- Q / K / V projection ------------------------------

def _linear_kernel(x_ref, w_ref, b_ref, o_ref):
    o_ref[...] = (jnp.dot(x_ref[...], w_ref[...],
                          preferred_element_type=jnp.float32)
                  + b_ref[...]).astype(o_ref.dtype)


def _pick_row_tile(m):
    for t in (512, 256, 128, 64, 32, 16, 8):
        if m % t == 0:
            return t
    return m


def _linear(x2d, w, b):
    """x2d: [M, H_in], w: [H_in, H_out], b: [H_out] -> [M, H_out]."""
    M, Hin = x2d.shape
    Hout = w.shape[1]
    tm = _pick_row_tile(M)
    return pl.pallas_call(
        _linear_kernel,
        out_shape=jax.ShapeDtypeStruct((M, Hout), x2d.dtype),
        grid_spec=pltpu.PrefetchScalarGridSpec(
            num_scalar_prefetch=0,
            grid=(M // tm,),
            in_specs=[
                pl.BlockSpec((tm, Hin), lambda i: (i, 0)),    # activations row tile
                pl.BlockSpec((Hin, Hout), lambda i: (0, 0)),  # weight (resident)
                pl.BlockSpec((1, Hout), lambda i: (0, 0)),    # bias
            ],
            out_specs=pl.BlockSpec((tm, Hout), lambda i: (i, 0)),
        ),
        compiler_params=pltpu.CompilerParams(
            dimension_semantics=("parallel",)),
    )(x2d, w, b.reshape(1, Hout))


# --------------------------------- attention core --------------------------------

def _attn_kernel(q_ref, k_ref, v_ref, mask_ref, o_ref, *, scale):
    # q: [S_from, d]   k, v: [S_to, d]   mask: [S_from, S_to] (additive)
    q = q_ref[...]
    k = k_ref[...]
    # scores[q, k] = sum_d q[q, d] * k[k, d]
    scores = jax.lax.dot_general(
        q, k, dimension_numbers=(((1,), (1,)), ((), ())),
        preferred_element_type=jnp.float32) * scale
    scores = scores + mask_ref[...]
    # numerically-stable softmax over the key axis
    m = jnp.max(scores, axis=-1, keepdims=True)
    e = jnp.exp(scores - m)
    probs = e / jnp.sum(e, axis=-1, keepdims=True)
    # TODO(synk): dropout on attention probs (identity in eval) and head_mask scaling.
    o_ref[...] = jnp.dot(probs, v_ref[...],
                         preferred_element_type=jnp.float32).astype(o_ref.dtype)


def canine_self_attention(from_tensor, to_tensor, params, *,
                          num_attention_heads, attention_mask=None):
    """from_tensor: [B, S_from, H], to_tensor: [B, S_to, H] -> [B, S_from, all_head]."""
    B, Sf, H = from_tensor.shape
    St = to_tensor.shape[1]
    all_head = params["w_q"].shape[1]
    nh = num_attention_heads
    d = all_head // nh

    # ---- Q/K/V projections (Pallas tiled matmuls) ----
    q = _linear(from_tensor.reshape(B * Sf, H), params["w_q"], params["b_q"])
    k = _linear(to_tensor.reshape(B * St, H), params["w_k"], params["b_k"])
    v = _linear(to_tensor.reshape(B * St, H), params["w_v"], params["b_v"])

    # [B, nh, S, d]  (layout plumbing done by XLA outside the kernel)
    q4 = q.reshape(B, Sf, nh, d).transpose(0, 2, 1, 3)
    k4 = k.reshape(B, St, nh, d).transpose(0, 2, 1, 3)
    v4 = v.reshape(B, St, nh, d).transpose(0, 2, 1, 3)

    # ---- additive attention mask [B, S_from, S_to] (matches HF CANINE logic) ----
    if attention_mask is None:
        add_mask = jnp.zeros((B, Sf, St), jnp.float32)
    elif attention_mask.ndim == 3:
        add_mask = ((1.0 - attention_mask.astype(jnp.float32))
                    * jnp.finfo(jnp.float32).min)
    elif attention_mask.ndim == 4 and attention_mask.shape[1] == 1:
        add_mask = attention_mask[:, 0].astype(jnp.float32)  # already additive
    else:
        # TODO(synk): per-head 4-D masks and relative position embeddings.
        raise NotImplementedError("unsupported attention_mask shape")

    kernel = functools.partial(_attn_kernel, scale=1.0 / math.sqrt(d))

    ctx4 = pl.pallas_call(
        kernel,
        out_shape=jax.ShapeDtypeStruct((B, nh, Sf, d), from_tensor.dtype),
        grid_spec=pltpu.PrefetchScalarGridSpec(
            num_scalar_prefetch=0,
            grid=(B, nh),
            in_specs=[
                pl.BlockSpec((None, None, Sf, d), lambda b, h: (b, h, 0, 0)),  # Q
                pl.BlockSpec((None, None, St, d), lambda b, h: (b, h, 0, 0)),  # K
                pl.BlockSpec((None, None, St, d), lambda b, h: (b, h, 0, 0)),  # V
                pl.BlockSpec((None, Sf, St), lambda b, h: (b, 0, 0)),          # mask
            ],
            out_specs=pl.BlockSpec((None, None, Sf, d), lambda b, h: (b, h, 0, 0)),
        ),
        compiler_params=pltpu.CompilerParams(
            dimension_semantics=("parallel", "parallel")),
    )(q4, k4, v4, add_mask)

    # merge heads -> [B, S_from, all_head]
    return ctx4.transpose(0, 2, 1, 3).reshape(B, Sf, all_head)


# ----------------------------------- reference ------------------------------------

def _reference(from_tensor, to_tensor, params, num_heads, attention_mask=None):
    B, Sf, H = from_tensor.shape
    St = to_tensor.shape[1]
    all_head = params["w_q"].shape[1]
    d = all_head // num_heads
    q = from_tensor @ params["w_q"] + params["b_q"]
    k = to_tensor @ params["w_k"] + params["b_k"]
    v = to_tensor @ params["w_v"] + params["b_v"]
    q = q.reshape(B, Sf, num_heads, d).transpose(0, 2, 1, 3)
    k = k.reshape(B, St, num_heads, d).transpose(0, 2, 1, 3)
    v = v.reshape(B, St, num_heads, d).transpose(0, 2, 1, 3)
    scores = jnp.einsum("bhqd,bhkd->bhqk", q, k) / math.sqrt(d)
    if attention_mask is not None:
        add = (1.0 - attention_mask.astype(jnp.float32)) * jnp.finfo(jnp.float32).min
        scores = scores + add[:, None, :, :]
    probs = jax.nn.softmax(scores, axis=-1)
    ctx = jnp.einsum("bhqk,bhkd->bhqd", probs, v)
    return ctx.transpose(0, 2, 1, 3).reshape(B, Sf, all_head)


if __name__ == "__main__":
    # Small CANINE-like config: hidden=32, 4 heads (head_dim=8), batch=2, seq=8.
    B, S, H, NH = 2, 8, 32, 4
    key = jax.random.PRNGKey(0)
    ks = jax.random.split(key, 7)

    from_tensor = jax.random.normal(ks[0], (B, S, H), dtype=jnp.float32)
    to_tensor = from_tensor  # CANINE self-attention passes the same tensor for from/to

    params = {
        "w_q": 0.1 * jax.random.normal(ks[1], (H, H), dtype=jnp.float32),
        "b_q": 0.1 * jax.random.normal(ks[2], (H,), dtype=jnp.float32),
        "w_k": 0.1 * jax.random.normal(ks[3], (H, H), dtype=jnp.float32),
        "b_k": 0.1 * jax.random.normal(ks[4], (H,), dtype=jnp.float32),
        "w_v": 0.1 * jax.random.normal(ks[5], (H, H), dtype=jnp.float32),
        "b_v": 0.1 * jax.random.normal(ks[6], (H,), dtype=jnp.float32),
    }

    # Binary 3-D mask [B, S_from, S_to]: batch 1 cannot attend to its last 2 positions.
    attention_mask = jnp.ones((B, S, S), dtype=jnp.float32)
    attention_mask = attention_mask.at[1, :, -2:].set(0.0)

    out = canine_self_attention(from_tensor, to_tensor, params,
                                num_attention_heads=NH,
                                attention_mask=attention_mask)
    out = jax.block_until_ready(out)

    ref = _reference(from_tensor, to_tensor, params, NH, attention_mask)
    assert out.shape == (B, S, H)
    err = float(jnp.max(jnp.abs(out - ref)))
    assert err < 1e-2, f"max abs err {err}"

    print("KERNEL_OK")
</pallas_src>

<mosaic_0001>
module attributes {stable_mosaic.version = 11 : i64} {
  func.func @_linear_kernel(%arg0: i32, %arg1: memref<16x32xf32, #tpu.memory_space<vmem>>, %arg2: memref<32x32xf32, #tpu.memory_space<vmem>>, %arg3: memref<1x32xf32, #tpu.memory_space<vmem>>, %arg4: memref<16x32xf32, #tpu.memory_space<vmem>>) attributes {dimension_semantics = [#tpu.dimension_semantics<parallel>], iteration_bounds = array<i64: 1>, scalar_prefetch = 0 : i64, scratch_operands = 0 : i64, tpu.core_type = #tpu.core_type<tc>, window_params = [{transform_indices = @transform_0, window_bounds = array<i64: 16, 32>}, {pipeline_mode = #tpu.pipeline_mode<synchronous>, transform_indices = @transform_1, window_bounds = array<i64: 32, 32>}, {pipeline_mode = #tpu.pipeline_mode<synchronous>, transform_indices = @transform_2, window_bounds = array<i64: 1, 32>}, {transform_indices = @transform_3, window_bounds = array<i64: 16, 32>}]} {
    %c0 = arith.constant 0 : index
    %c0_0 = arith.constant 0 : index
    %0 = vector.load %arg1[%c0, %c0_0] : memref<16x32xf32, #tpu.memory_space<vmem>>, vector<16x32xf32>
    %c0_1 = arith.constant 0 : index
    %c0_2 = arith.constant 0 : index
    %1 = vector.load %arg2[%c0_1, %c0_2] : memref<32x32xf32, #tpu.memory_space<vmem>>, vector<32x32xf32>
    %cst = arith.constant dense<0.000000e+00> : vector<16x32xf32>
    %2 = tpu.matmul %0, %1, %cst {dimension_numbers = #tpu.dot_dimension_numbers<[1], [0], [0], [1], [0, 0, 1, 1], [], []>} : vector<16x32xf32>, vector<32x32xf32>, vector<16x32xf32> -> vector<16x32xf32>
    %c0_3 = arith.constant 0 : index
    %c0_4 = arith.constant 0 : index
    %3 = vector.load %arg3[%c0_3, %c0_4] : memref<1x32xf32, #tpu.memory_space<vmem>>, vector<1x32xf32>
    %4 = vector.broadcast %3 : vector<1x32xf32> to vector<16x32xf32>
    %5 = arith.addf %2, %4 : vector<16x32xf32>
    %c0_5 = arith.constant 0 : index
    %c0_6 = arith.constant 0 : index
    %6 = vector.load %arg4[%c0_5, %c0_6] : memref<16x32xf32, #tpu.memory_space<vmem>>, vector<16x32xf32>
    tpu.vector_store %arg4[%c0_5, %c0_6], %5 {strides = array<i32>} : memref<16x32xf32, #tpu.memory_space<vmem>>, vector<16x32xf32>,
    return
  }
  func.func @transform_0(%arg0: i32) -> (i32, i32) {
    %c0_i32 = arith.constant 0 : i32
    %c0_i32_0 = arith.constant 0 : i32
    return %arg0, %c0_i32 : i32, i32
  }
  func.func @transform_1(%arg0: i32) -> (i32, i32) {
    %c0_i32 = arith.constant 0 : i32
    %c0_i32_0 = arith.constant 0 : i32
    %c0_i32_1 = arith.constant 0 : i32
    return %c0_i32, %c0_i32_0 : i32, i32
  }
  func.func @transform_2(%arg0: i32) -> (i32, i32) {
    %c0_i32 = arith.constant 0 : i32
    %c0_i32_0 = arith.constant 0 : i32
    %c0_i32_1 = arith.constant 0 : i32
    return %c0_i32, %c0_i32_0 : i32, i32
  }
  func.func @transform_3(%arg0: i32) -> (i32, i32) {
    %c0_i32 = arith.constant 0 : i32
    %c0_i32_0 = arith.constant 0 : i32
    return %arg0, %c0_i32 : i32, i32
  }
}

</mosaic_0001>

<llo_original>
// kernel: tpu_custom_call.1
$region0: #{tpu_custom_call.1}
  #allocation0 [shape = 'u32[]', space=smem, size = 0x4, offset = 0x4, fixed_abs, tag = 'smem constant byte address 0x4 - core index']
  #allocation1 [shape = 'u32[72,128]{1,0:T(1,128)}', space=vmem, size = 0x9000, scoped, tag = 'internal scratch']
  %s0 = inlined_call_operand.hbm [shape: f32[16,32], index: 0, kind: input, shape index: {}]
  %s1 = inlined_call_operand.hbm [shape: f32[32,32], index: 1, kind: input, shape index: {}]
  %s2 = inlined_call_operand.vmem [shape: f32[1,32], index: 2, kind: input, shape index: {}]
  %s3 = inlined_call_operand.hbm [shape: f32[16,32], index: 3, kind: output, shape index: {}]
  %s4 = sld [smem:[#allocation0]]
  $region30: #{tpu_custom_call.1} parent=0
    _
  %s6 = ssub.s32 1, %s4
  %s7 = scalar_select 0, %s6, %s4
  $region1: #{tpu_custom_call.1} parent=0
    #allocation2 [shape = 'u8[8192]{0}', space=vmem, size = 0x2000, scoped, tag = 'input window, operand 0, single buffered']
    #allocation3 [shape = 's32[1]{0}', space=sflag, size = 0x4, scoped, tag = 'scoped memory for tpu_custom_call.1']
    #allocation4 [shape = 's32[1]{0}', space=sflag, size = 0x4, scoped, tag = 'scoped memory for tpu_custom_call.1']
    #allocation5 [shape = 'u8[16384]{0}', space=vmem, size = 0x4000, scoped, tag = 'input window, operand 1, single buffered']
    #allocation6 [shape = 's32[1]{0}', space=sflag, size = 0x4, scoped, tag = 'scoped memory for tpu_custom_call.1']
    #allocation7 [shape = 'u8[8192]{0}', space=vmem, size = 0x2000, scoped, tag = 'output window, operand 0, single buffered']
    %8 = vsyncpa [#allocation3], 0
    %9 = vsyncpa [#allocation6], 0
    %10 = vsyncpa [#allocation4], 0
    // Predicated region
    $region2: #{tpu_custom_call.1} parent=1 // pred_check
      _
    $region3: #{tpu_custom_call.1} parent=1 // pred_check_branch
      %12 = sbr.rel (0) target = $region5
    $region4: #{tpu_custom_call.1} parent=1 // pred_region
      %14 = vsyncadd [#allocation3], 0
      %s15 = sshll.u32 %s0, 4
      %s16 = int_to_ptr.hbm [resolvable:$true] %s15
      %s17 = sshll.u32 [#allocation2], 4
      %s18 = int_to_ptr.vmem [resolvable:$true] %s17
      %23 = dma.hbm_to_vmem [thread:$0]  %s16, 256, %s18, [#allocation3], 128, 128, 8
    $region5: #{tpu_custom_call.1} parent=1 // pred_fallthru
      _
    // Predicated region
    $region6: #{tpu_custom_call.1} parent=1 // pred_check
      _
    $region7: #{tpu_custom_call.1} parent=1 // pred_check_branch
      %25 = sbr.rel (0) target = $region9
    $region8: #{tpu_custom_call.1} parent=1 // pred_region
      %27 = vsyncadd [#allocation6], 0
      %s28 = sshll.u32 %s1, 4
      %s29 = int_to_ptr.hbm [resolvable:$true] %s28
      %s30 = sshll.u32 [#allocation5], 4
      %s31 = int_to_ptr.vmem [resolvable:$true] %s30
      %36 = dma.hbm_to_vmem [thread:$0]  %s29, 512, %s31, [#allocation6], 128, 128, 8
    $region9: #{tpu_custom_call.1} parent=1 // pred_fallthru
      _
    // Predicated region
    $region10: #{tpu_custom_call.1} parent=1 // pred_check
      _
    $region11: #{tpu_custom_call.1} parent=1 // pred_check_branch
      %38 = sbr.rel (0) target = $region13
    $region12: #{tpu_custom_call.1} parent=1 // pred_region
      _
    $region13: #{tpu_custom_call.1} parent=1 // pred_fallthru
      _
    // Predicated region
    $region14: #{tpu_custom_call.1} parent=1 // pred_check
      _
    $region15: #{tpu_custom_call.1} parent=1 // pred_check_branch
      %40 = sbr.rel (0) target = $region17
    $region16: #{tpu_custom_call.1} parent=1 // pred_region
      %42 = dma.done [#allocation3], 256
    $region17: #{tpu_custom_call.1} parent=1 // pred_fallthru
      _
    // Predicated region
    $region18: #{tpu_custom_call.1} parent=1 // pred_check
      _
    $region19: #{tpu_custom_call.1} parent=1 // pred_check_branch
      %44 = sbr.rel (0) target = $region21
    $region20: #{tpu_custom_call.1} parent=1 // pred_region
      %46 = dma.done [#allocation6], 512
    $region21: #{tpu_custom_call.1} parent=1 // pred_fallthru
      _
    %v47 = vld [vmem:[#allocation2] sm:$0xff]
    %v48 = vld [vmem:[#allocation2 + $0x8] sm:$0xff]
    %v49 = vld [vmem:[#allocation5] sm:$0xff]
    %v50 = vld [vmem:[#allocation5 + $0x8] sm:$0xff]
    %v51 = vld [vmem:[#allocation5 + $0x10] sm:$0xff]
    %v52 = vld [vmem:[#allocation5 + $0x18] sm:$0xff]
    %v53 = vld [vmem:[%s2] sm:$0x1]
    %v55 = vperm.slane %v53, 0
    %vm57 = vcmask 261120
    %v59 = vsel %vm57, %v47, 0
    %v62 = vsel %vm57, %v48, 0
    %64 = vmatpush.msra.mxu0 0.0
    %65 = vmatpush.msra.mxu0 0.0
    %66 = vmatpush.msra.mxu0 0.0
    %67 = vmatpush.msra.mxu0 0.0
    %68 = vmatpush.msra.mxu0 0.0
    %69 = vmatpush.msra.mxu0 0.0
    %70 = vmatpush.msra.mxu0 0.0
    %71 = vmatpush.msra.mxu0 0.0
    %72 = vmatpush.msra.mxu0 0.0
    %73 = vmatpush.msra.mxu0 0.0
    %74 = vmatpush.msra.mxu0 0.0
    %75 = vmatpush.msra.mxu0 0.0
    %76 = vmatpush.msra.mxu0 %v52
    %77 = vmatpush.msra.mxu0 %v51
    %78 = vmatpush.msra.mxu0 %v50
    %79 = vmatpush.msra.mxu0 %v49
    %80 = vmatmul.f32.gmra.mxu0 %v59
    %v81 = vpop.f32.mrf.mxu0
    %v82 = vadd.f32 %v55, %v81
    %83 = vmatmul.f32.gmra.mxu0 %v62
    %v84 = vpop.f32.mrf.mxu0
    %v85 = vadd.f32 %v55, %v84
    %86 = vdwg.mxu0
    %87 = vst.msk [vmem:[#allocation7] sm:$0xff] %vm57, %v82
    %88 = vst.msk [vmem:[#allocation7 + $0x8] sm:$0xff] %vm57, %v85
    // Predicated region
    $region22: #{tpu_custom_call.1} parent=1 // pred_check
      _
    $region23: #{tpu_custom_call.1} parent=1 // pred_check_branch
      %90 = sbr.rel (0) target = $region25
    $region24: #{tpu_custom_call.1} parent=1 // pred_region
      %92 = vsyncadd [#allocation4], 0
      %s93 = sshll.u32 [#allocation7], 4
      %s94 = int_to_ptr.vmem [resolvable:$true] %s93
      %s95 = sshll.u32 %s3, 4
      %s96 = int_to_ptr.hbm [resolvable:$true] %s95
      %101 = dma.vmem_to_hbm [thread:$0]  %s94, 256, %s96, [#allocation4], 128, 128, 8
    $region25: #{tpu_custom_call.1} parent=1 // pred_fallthru
      _
    // Predicated region
    $region26: #{tpu_custom_call.1} parent=1 // pred_check
      _
    $region27: #{tpu_custom_call.1} parent=1 // pred_check_branch
      %103 = sbr.rel (0) target = $region29
    $region28: #{tpu_custom_call.1} parent=1 // pred_region
      %105 = dma.done [#allocation4], 256
    $region29: #{tpu_custom_call.1} parent=1 // pred_fallthru
      _
    %106 = vsyncpa [#allocation3], 1
    %107 = vsyncpa [#allocation6], 1
    %108 = vsyncpa [#allocation4], 1

</llo_original>
